<compile_context>
chip_gen: v7x
topology: tpu7x:2x2x1
jax: 0.10.0
libtpu: 0.0.40
codegen_flags: <defaults>
</compile_context>

<pallas_src>
import functools

import jax
import jax.numpy as jnp
from jax import lax
from jax.experimental import pallas as pl
from jax.experimental.pallas import tpu as pltpu


# ------------------------------ in-kernel helpers ---------------------------

def _mm(a, b):
    return jnp.dot(a, b, preferred_element_type=jnp.float32)


def _dw3x3(h, scr_ref, wt, bias_t, *, H, W, C):
    """3x3 depthwise conv, stride 1, zero-pad 1, on an (H, W*C) lane-dense slab.

    h       : (H, W*C) f32 value
    scr_ref : (H+2, (W+2)*C) VMEM scratch (halo buffer, zero border)
    wt      : (9, W*C) per-tap per-channel BN-folded weights, tiled along lanes
    bias_t  : (1, W*C) BN-folded bias, tiled along lanes
    """
    WC = W * C
    Wp = (W + 2) * C
    # Zero only the halo border; the interior is fully overwritten right below.
    # Re-zeroed every grid step on purpose: the batch axis is "parallel"
    # (megacore-shardable), so we must not rely on cross-iteration scratch state.
    zrow = jnp.zeros((1, Wp), jnp.float32)
    scr_ref[pl.ds(0, 1), :] = zrow                        # top halo row
    scr_ref[pl.ds(H + 1, 1), :] = zrow                    # bottom halo row
    zcol = jnp.zeros((H, C), jnp.float32)
    scr_ref[pl.ds(1, H), pl.ds(0, C)] = zcol              # left halo column
    scr_ref[pl.ds(1, H), pl.ds(C + WC, C)] = zcol         # right halo column
    scr_ref[pl.ds(1, H), pl.ds(C, WC)] = h                # interior
    acc = jnp.broadcast_to(bias_t, (H, WC))
    for di in range(3):
        for dj in range(3):
            t = di * 3 + dj
            win = scr_ref[pl.ds(di, H), pl.ds(dj * C, WC)]
            acc = acc + wt[t:t + 1, :] * win              # VPU FMA per tap
    return acc


# --------------------------------- kernels ----------------------------------

def _inverted_residual_s1_kernel(x_ref, bd1_ref, b1_ref, wt_ref, bdw_ref,
                                 bd3_ref, b3_ref, pass_ref, o_ref, scr_ref,
                                 *, H, W, bf):
    x = x_ref[0]                                                   # (H, W*Cin)
    # branch2: 1x1 conv (chunk-of-x2 folded into bd1) -> BN -> ReLU
    h = jnp.maximum(_mm(x, bd1_ref[...]) + b1_ref[...], 0.0)       # (H, W*bf)
    # dw3x3 (stride 1) -> BN   (halo in VMEM scratch)
    d = _dw3x3(h, scr_ref, wt_ref[...], bdw_ref[...], H=H, W=W, C=bf)
    # 1x1 conv -> BN -> ReLU, mapped directly into ODD (channel-shuffled) slots
    y = jnp.maximum(_mm(d, bd3_ref[...]) + b3_ref[...], 0.0)       # (H, W*Cout)
    # x1 passthrough into EVEN (channel-shuffled) slots
    y = y + _mm(x, pass_ref[...])
    o_ref[0] = y.astype(o_ref.dtype)


def _inverted_residual_s2_kernel(x_ref,
                                 wt1_ref, bdw1_ref, bd2_ref, b2_ref,
                                 bd1_ref, b1_ref, wt2_ref, bdw2_ref,
                                 bd3_ref, b3_ref, sh_ref,
                                 o_ref, scr1_ref, scr2_ref,
                                 *, H, W, cin, bf):
    x = x_ref[0]                                                   # (H, W*cin)
    sh = sh_ref[...]                                               # (Ho, H) row subsample
    # ---- branch1: dw3x3(s2) -> BN -> 1x1 -> BN -> ReLU  -> EVEN output slots
    d1 = _dw3x3(x, scr1_ref, wt1_ref[...], bdw1_ref[...], H=H, W=W, C=cin)
    d1 = _mm(sh, d1)                                               # (Ho, W*cin)
    y1 = jnp.maximum(_mm(d1, bd2_ref[...]) + b2_ref[...], 0.0)     # (Ho, Wo*Cout)
    # ---- branch2: 1x1 -> BN -> ReLU -> dw3x3(s2) -> BN -> 1x1 -> BN -> ReLU -> ODD
    h = jnp.maximum(_mm(x, bd1_ref[...]) + b1_ref[...], 0.0)       # (H, W*bf)
    d2 = _dw3x3(h, scr2_ref, wt2_ref[...], bdw2_ref[...], H=H, W=W, C=bf)
    d2 = _mm(sh, d2)                                               # (Ho, W*bf)
    y2 = jnp.maximum(_mm(d2, bd3_ref[...]) + b3_ref[...], 0.0)     # (Ho, Wo*Cout)
    o_ref[0] = (y1 + y2).astype(o_ref.dtype)


# ------------------- host-side BN folding & operand packing -----------------

def _bn_fold(bn):
    scale = bn["gamma"] * lax.rsqrt(bn["var"] + 1e-5)
    bias = bn["beta"] - bn["mean"] * scale
    return scale, bias


def _tile_lanes(v, reps):
    return jnp.tile(v, reps)[None, :]                  # (1, reps*len(v))


def _pack_operands(params, in_channels, out_channels, stride, H, W):
    """Fold eval-mode BN into weights and build lane-space (block-diag) matrices."""
    bf = out_channels // 2
    Ho, Wo = H // stride, W // stride
    cin, cout = in_channels, out_channels

    p2 = params["branch2"]
    s1, bb1 = _bn_fold(p2["bn1"])
    s2, bb2 = _bn_fold(p2["bn2"])
    s3, bb3 = _bn_fold(p2["bn3"])
    w1f = s1[:, None] * p2["w1"]                       # (bf, c2in)
    w3f = s3[:, None] * p2["w3"]                       # (bf, bf)
    wdw2f = s2[:, None] * p2["wdw"].reshape(bf, 9)     # (bf, 9)

    ops = {}
    eyeW = jnp.eye(W, dtype=jnp.float32)
    if stride == 1:
        # branch2's first 1x1 reads the SECOND channel half (torch chunk) of x.
        P1 = jnp.zeros((cin, bf), jnp.float32).at[bf:, :].set(w1f.T)
        ops["bd1"] = jnp.kron(eyeW, P1)                                   # (W*cin, W*bf)
        # last 1x1 writes the ODD (channel-shuffled) output slots.
        R3 = jnp.zeros((bf, cout), jnp.float32).at[:, 1::2].set(w3f.T)
        ops["bd3"] = jnp.kron(eyeW, R3)                                   # (W*bf, W*cout)
        ops["b3t"] = _tile_lanes(jnp.zeros((cout,), jnp.float32).at[1::2].set(bb3), W)
        # x1 passthrough into the EVEN output slots.
        Q = jnp.zeros((cin, cout), jnp.float32)
        Q = Q.at[jnp.arange(bf), 2 * jnp.arange(bf)].set(1.0)
        ops["passbd"] = jnp.kron(eyeW, Q)                                 # (W*cin, W*cout)
    else:
        selW = jnp.zeros((W, Wo), jnp.float32)
        selW = selW.at[2 * jnp.arange(Wo), jnp.arange(Wo)].set(1.0)       # W-subsample
        # ---- branch1 ----
        p1 = params["branch1"]
        sb1, bbb1 = _bn_fold(p1["bn1"])                 # over cin
        sb2, bbb2 = _bn_fold(p1["bn2"])                 # over bf
        wdw1f = sb1[:, None] * p1["wdw"].reshape(cin, 9)
        w2f = sb2[:, None] * p1["w2"]                   # (bf, cin)
        ops["wt1"] = jnp.tile(wdw1f.T, (1, W))                            # (9, W*cin)
        ops["bdw1t"] = _tile_lanes(bbb1, W)                               # (1, W*cin)
        P2 = jnp.zeros((cin, cout), jnp.float32).at[:, 0::2].set(w2f.T)
        ops["bd2"] = jnp.kron(selW, P2)                                   # (W*cin, Wo*cout)
        ops["b2t"] = _tile_lanes(jnp.zeros((cout,), jnp.float32).at[0::2].set(bbb2), Wo)
        # ---- branch2 ----
        ops["bd1"] = jnp.kron(eyeW, w1f.T)                                # (W*cin, W*bf)
        R3 = jnp.zeros((bf, cout), jnp.float32).at[:, 1::2].set(w3f.T)
        ops["bd3"] = jnp.kron(selW, R3)                                   # (W*bf, Wo*cout)
        ops["b3t"] = _tile_lanes(jnp.zeros((cout,), jnp.float32).at[1::2].set(bb3), Wo)
        # H-subsample (rows)
        sh = jnp.zeros((Ho, H), jnp.float32)
        ops["sh"] = sh.at[jnp.arange(Ho), 2 * jnp.arange(Ho)].set(1.0)
    # common branch2 pieces (full-resolution intermediates)
    ops["b1t"] = _tile_lanes(bb1, W)                                      # (1, W*bf)
    ops["wt2"] = jnp.tile(wdw2f.T, (1, W))                                # (9, W*bf)
    ops["bdw2t"] = _tile_lanes(bb2, W)                                    # (1, W*bf)
    return ops


# ------------------------------ module forward ------------------------------

def _inverted_residual_forward_impl(params, x_nchw, stride):
    B, Cin, H, W = x_nchw.shape
    Cout = Cin if stride == 1 else 2 * params["branch2"]["w1"].shape[0]
    bf = Cout // 2
    Ho, Wo = H // stride, W // stride
    ops = _pack_operands(params, Cin, Cout, stride, H, W)

    # NCHW -> (B, H, W*C) lane-dense slabs (one tiny transpose, reshape is free).
    x = jnp.transpose(x_nchw, (0, 2, 3, 1)).reshape(B, H, W * Cin)

    def full_spec(a):
        return pl.BlockSpec(a.shape, lambda b, _n=a.ndim: (0,) * _n)

    cp = pltpu.CompilerParams(dimension_semantics=("parallel",),
                              vmem_limit_bytes=32 * 1024 * 1024)

    if stride == 1:
        operands = (x, ops["bd1"], ops["b1t"], ops["wt2"], ops["bdw2t"],
                    ops["bd3"], ops["b3t"], ops["passbd"])
        kern = functools.partial(_inverted_residual_s1_kernel, H=H, W=W, bf=bf)
        scratch = [pltpu.VMEM((H + 2, (W + 2) * bf), jnp.float32)]
    else:
        operands = (x, ops["wt1"], ops["bdw1t"], ops["bd2"], ops["b2t"],
                    ops["bd1"], ops["b1t"], ops["wt2"], ops["bdw2t"],
                    ops["bd3"], ops["b3t"], ops["sh"])
        kern = functools.partial(_inverted_residual_s2_kernel, H=H, W=W, cin=Cin, bf=bf)
        scratch = [pltpu.VMEM((H + 2, (W + 2) * Cin), jnp.float32),
                   pltpu.VMEM((H + 2, (W + 2) * bf), jnp.float32)]

    in_specs = [pl.BlockSpec((1, H, W * Cin), lambda b: (b, 0, 0))]
    in_specs += [full_spec(a) for a in operands[1:]]

    out = pl.pallas_call(
        kern,
        out_shape=jax.ShapeDtypeStruct((B, Ho, Wo * Cout), jnp.float32),
        grid=(B,),
        in_specs=in_specs,
        out_specs=pl.BlockSpec((1, Ho, Wo * Cout), lambda b: (b, 0, 0)),
        scratch_shapes=scratch,
        compiler_params=cp,
    )(*operands)

    # (B, Ho, Wo*Cout) -> NCHW (reshape is free, one transpose back).
    return jnp.transpose(out.reshape(B, Ho, Wo, Cout), (0, 3, 1, 2))


# One executable per (shapes, stride): BN folding + transposes + kernel fused.
inverted_residual_forward = jax.jit(_inverted_residual_forward_impl,
                                    static_argnums=2)


# ------------------------ deterministic parameter init ----------------------

def _init_bn(key, c):
    k1, k2, k3, k4 = jax.random.split(key, 4)
    return {"gamma": jax.random.uniform(k1, (c,), jnp.float32, 0.5, 1.5),
            "beta": 0.1 * jax.random.normal(k2, (c,), jnp.float32),
            "mean": 0.1 * jax.random.normal(k3, (c,), jnp.float32),
            "var": jax.random.uniform(k4, (c,), jnp.float32, 0.5, 1.5)}


def init_inverted_residual(key, in_channels, out_channels, stride):
    bf = out_channels // 2
    ks = jax.random.split(key, 10)
    params = {}
    if stride > 1:
        params["branch1"] = {
            "wdw": 0.2 * jax.random.normal(ks[0], (in_channels, 3, 3), jnp.float32),
            "bn1": _init_bn(ks[1], in_channels),
            "w2": 0.2 * jax.random.normal(ks[2], (bf, in_channels), jnp.float32),
            "bn2": _init_bn(ks[3], bf),
        }
    c2_in = in_channels if stride > 1 else bf
    params["branch2"] = {
        "w1": 0.2 * jax.random.normal(ks[4], (bf, c2_in), jnp.float32),
        "bn1": _init_bn(ks[5], bf),
        "wdw": 0.2 * jax.random.normal(ks[6], (bf, 3, 3), jnp.float32),
        "bn2": _init_bn(ks[7], bf),
        "w3": 0.2 * jax.random.normal(ks[8], (bf, bf), jnp.float32),
        "bn3": _init_bn(ks[9], bf),
    }
    return params


# ----------------------------- pure-JAX reference ----------------------------

def _ref_bn(x, bn):
    scale = bn["gamma"] * lax.rsqrt(bn["var"] + 1e-5)
    bias = bn["beta"] - bn["mean"] * scale
    return x * scale[None, :, None, None] + bias[None, :, None, None]


def _ref_pw(x, w):
    return jnp.einsum("oc,bchw->bohw", w, x, precision=lax.Precision.HIGHEST)


def _ref_dw(x, w, stride):
    C = x.shape[1]
    return lax.conv_general_dilated(
        x, w[:, None, :, :], window_strides=(stride, stride),
        padding=((1, 1), (1, 1)),
        dimension_numbers=("NCHW", "OIHW", "NCHW"),
        feature_group_count=C, precision=lax.Precision.HIGHEST)


def _ref_branch2(p, x, stride):
    h = jax.nn.relu(_ref_bn(_ref_pw(x, p["w1"]), p["bn1"]))
    h = _ref_bn(_ref_dw(h, p["wdw"], stride), p["bn2"])
    return jax.nn.relu(_ref_bn(_ref_pw(h, p["w3"]), p["bn3"]))


def _ref_branch1(p, x, stride):
    h = _ref_bn(_ref_dw(x, p["wdw"], stride), p["bn1"])
    return jax.nn.relu(_ref_bn(_ref_pw(h, p["w2"]), p["bn2"]))


def _ref_channel_shuffle(x, groups=2):
    B, C, H, W = x.shape
    return x.reshape(B, groups, C // groups, H, W).transpose(0, 2, 1, 3, 4).reshape(B, C, H, W)


def inverted_residual_reference(params, x, stride):
    if stride == 1:
        c = x.shape[1]
        x1, x2 = x[:, : c // 2], x[:, c // 2:]
        out = jnp.concatenate([x1, _ref_branch2(params["branch2"], x2, 1)], axis=1)
    else:
        out = jnp.concatenate([_ref_branch1(params["branch1"], x, stride),
                               _ref_branch2(params["branch2"], x, stride)], axis=1)
    return _ref_channel_shuffle(out, 2)


# ----------------------------------- main ------------------------------------

if __name__ == "__main__":
    key = jax.random.PRNGKey(0)
    kx, kp1, kp2 = jax.random.split(key, 3)
    x = jax.random.normal(kx, (2, 8, 16, 16), jnp.float32)     # NCHW, like PyTorch

    # stride=1 block (in_channels == out_channels, required by chunk/concat)
    p1 = init_inverted_residual(kp1, 8, 8, stride=1)
    y1 = inverted_residual_forward(p1, x, 1)
    y1_ref = inverted_residual_reference(p1, x, 1)

    # stride=2 downsampling block: 8 -> 16 channels, 16x16 -> 8x8 spatial
    p2 = init_inverted_residual(kp2, 8, 16, stride=2)
    y2 = inverted_residual_forward(p2, x, 2)
    y2_ref = inverted_residual_reference(p2, x, 2)

    jax.block_until_ready((y1, y2))
    assert y1.shape == (2, 8, 16, 16), y1.shape
    assert y2.shape == (2, 16, 8, 8), y2.shape
    err1 = float(jnp.max(jnp.abs(y1 - y1_ref)))
    err2 = float(jnp.max(jnp.abs(y2 - y2_ref)))
    assert err1 < 1e-2, err1
    assert err2 < 1e-2, err2
    print("KERNEL_OK")
</pallas_src>

<mosaic_0001>
module attributes {stable_mosaic.version = 11 : i64} {
  func.func @_inverted_residual_s1_kernel(%arg0: i32, %arg1: memref<1x16x128xf32, #tpu.memory_space<vmem>>, %arg2: memref<128x64xf32, #tpu.memory_space<vmem>>, %arg3: memref<1x64xf32, #tpu.memory_space<vmem>>, %arg4: memref<9x64xf32, #tpu.memory_space<vmem>>, %arg5: memref<1x64xf32, #tpu.memory_space<vmem>>, %arg6: memref<64x128xf32, #tpu.memory_space<vmem>>, %arg7: memref<1x128xf32, #tpu.memory_space<vmem>>, %arg8: memref<128x128xf32, #tpu.memory_space<vmem>>, %arg9: memref<1x16x128xf32, #tpu.memory_space<vmem>>, %arg10: memref<18x72xf32, #tpu.memory_space<vmem>>) attributes {dimension_semantics = [#tpu.dimension_semantics<parallel>], iteration_bounds = array<i64: 2>, scalar_prefetch = 0 : i64, scratch_operands = 1 : i64, tpu.core_type = #tpu.core_type<tc>, window_params = [{transform_indices = @transform_0, window_bounds = array<i64: 1, 16, 128>}, {pipeline_mode = #tpu.pipeline_mode<synchronous>, transform_indices = @transform_1, window_bounds = array<i64: 128, 64>}, {pipeline_mode = #tpu.pipeline_mode<synchronous>, transform_indices = @transform_2, window_bounds = array<i64: 1, 64>}, {pipeline_mode = #tpu.pipeline_mode<synchronous>, transform_indices = @transform_3, window_bounds = array<i64: 9, 64>}, {pipeline_mode = #tpu.pipeline_mode<synchronous>, transform_indices = @transform_4, window_bounds = array<i64: 1, 64>}, {pipeline_mode = #tpu.pipeline_mode<synchronous>, transform_indices = @transform_5, window_bounds = array<i64: 64, 128>}, {pipeline_mode = #tpu.pipeline_mode<synchronous>, transform_indices = @transform_6, window_bounds = array<i64: 1, 128>}, {pipeline_mode = #tpu.pipeline_mode<synchronous>, transform_indices = @transform_7, window_bounds = array<i64: 128, 128>}, {transform_indices = @transform_8, window_bounds = array<i64: 1, 16, 128>}]} {
    %c0 = arith.constant 0 : index
    %c0_0 = arith.constant 0 : index
    %c0_1 = arith.constant 0 : index
    %0 = vector.load %arg1[%c0, %c0_0, %c0_1] : memref<1x16x128xf32, #tpu.memory_space<vmem>>, vector<1x16x128xf32>
    %1 = vector.shape_cast %0 : vector<1x16x128xf32> to vector<16x128xf32>
    %c0_2 = arith.constant 0 : index
    %c0_3 = arith.constant 0 : index
    %2 = vector.load %arg2[%c0_2, %c0_3] : memref<128x64xf32, #tpu.memory_space<vmem>>, vector<128x64xf32>
    %cst = arith.constant dense<0.000000e+00> : vector<16x64xf32>
    %3 = tpu.matmul %1, %2, %cst {dimension_numbers = #tpu.dot_dimension_numbers<[1], [0], [0], [1], [0, 0, 1, 1], [], []>} : vector<16x128xf32>, vector<128x64xf32>, vector<16x64xf32> -> vector<16x64xf32>
    %c0_4 = arith.constant 0 : index
    %c0_5 = arith.constant 0 : index
    %4 = vector.load %arg3[%c0_4, %c0_5] : memref<1x64xf32, #tpu.memory_space<vmem>>, vector<1x64xf32>
    %5 = vector.broadcast %4 : vector<1x64xf32> to vector<16x64xf32>
    %6 = arith.addf %3, %5 : vector<16x64xf32>
    %cst_6 = arith.constant 0.000000e+00 : f32
    %7 = vector.broadcast %cst_6 : f32 to vector<16x64xf32>
    %8 = arith.maximumf %6, %7 : vector<16x64xf32>
    %c0_7 = arith.constant 0 : index
    %c0_8 = arith.constant 0 : index
    %9 = vector.load %arg4[%c0_7, %c0_8] : memref<9x64xf32, #tpu.memory_space<vmem>>, vector<9x64xf32>
    %c0_9 = arith.constant 0 : index
    %c0_10 = arith.constant 0 : index
    %10 = vector.load %arg5[%c0_9, %c0_10] : memref<1x64xf32, #tpu.memory_space<vmem>>, vector<1x64xf32>
    %cst_11 = arith.constant 0.000000e+00 : f32
    %11 = vector.broadcast %cst_11 : f32 to vector<1x72xf32>
    %c0_12 = arith.constant 0 : index
    %c0_13 = arith.constant 0 : index
    %12 = vector.load %arg10[%c0_12, %c0_13] : memref<18x72xf32, #tpu.memory_space<vmem>>, vector<1x72xf32>
    tpu.vector_store %arg10[%c0_12, %c0_13], %11 {strides = array<i32>} : memref<18x72xf32, #tpu.memory_space<vmem>>, vector<1x72xf32>,
    %c17 = arith.constant 17 : index
    %c0_14 = arith.constant 0 : index
    %13 = vector.load %arg10[%c17, %c0_14] : memref<18x72xf32, #tpu.memory_space<vmem>>, vector<1x72xf32>
    tpu.vector_store %arg10[%c17, %c0_14], %11 {strides = array<i32>} : memref<18x72xf32, #tpu.memory_space<vmem>>, vector<1x72xf32>,
    %cst_15 = arith.constant 0.000000e+00 : f32
    %14 = vector.broadcast %cst_15 : f32 to vector<16x4xf32>
    %c1 = arith.constant 1 : index
    %c0_16 = arith.constant 0 : index
    %15 = vector.load %arg10[%c1, %c0_16] : memref<18x72xf32, #tpu.memory_space<vmem>>, vector<16x4xf32>
    tpu.vector_store %arg10[%c1, %c0_16], %14 {strides = array<i32>} : memref<18x72xf32, #tpu.memory_space<vmem>>, vector<16x4xf32>,
    %c1_17 = arith.constant 1 : index
    %c68 = arith.constant 68 : index
    %16 = vector.load %arg10[%c1_17, %c68] : memref<18x72xf32, #tpu.memory_space<vmem>>, vector<16x4xf32>
    tpu.vector_store %arg10[%c1_17, %c68], %14 {strides = array<i32>} : memref<18x72xf32, #tpu.memory_space<vmem>>, vector<16x4xf32>,
    %c1_18 = arith.constant 1 : index
    %c4 = arith.constant 4 : index
    %17 = vector.load %arg10[%c1_18, %c4] : memref<18x72xf32, #tpu.memory_space<vmem>>, vector<16x64xf32>
    tpu.vector_store %arg10[%c1_18, %c4], %8 {strides = array<i32>} : memref<18x72xf32, #tpu.memory_space<vmem>>, vector<16x64xf32>,
    %18 = vector.shape_cast %10 : vector<1x64xf32> to vector<1x64xf32>
    %19 = vector.broadcast %18 : vector<1x64xf32> to vector<16x64xf32>
    %c0_19 = arith.constant 0 : index
    %c0_20 = arith.constant 0 : index
    %20 = vector.load %arg10[%c0_19, %c0_20] : memref<18x72xf32, #tpu.memory_space<vmem>>, vector<16x64xf32>
    %21 = vector.extract_strided_slice %9 {offsets = [0, 0], sizes = [1, 64], strides = [1, 1]} : vector<9x64xf32> to vector<1x64xf32>
    %22 = vector.broadcast %21 : vector<1x64xf32> to vector<16x64xf32>
    %23 = arith.mulf %22, %20 : vector<16x64xf32>
    %24 = arith.addf %19, %23 : vector<16x64xf32>
    %c0_21 = arith.constant 0 : index
    %c4_22 = arith.constant 4 : index
    %25 = vector.load %arg10[%c0_21, %c4_22] : memref<18x72xf32, #tpu.memory_space<vmem>>, vector<16x64xf32>
    %26 = vector.extract_strided_slice %9 {offsets = [1, 0], sizes = [1, 64], strides = [1, 1]} : vector<9x64xf32> to vector<1x64xf32>
    %27 = vector.broadcast %26 : vector<1x64xf32> to vector<16x64xf32>
    %28 = arith.mulf %27, %25 : vector<16x64xf32>
    %29 = arith.addf %24, %28 : vector<16x64xf32>
    %c0_23 = arith.constant 0 : index
    %c8 = arith.constant 8 : index
    %30 = vector.load %arg10[%c0_23, %c8] : memref<18x72xf32, #tpu.memory_space<vmem>>, vector<16x64xf32>
    %31 = vector.extract_strided_slice %9 {offsets = [2, 0], sizes = [1, 64], strides = [1, 1]} : vector<9x64xf32> to vector<1x64xf32>
    %32 = vector.broadcast %31 : vector<1x64xf32> to vector<16x64xf32>
    %33 = arith.mulf %32, %30 : vector<16x64xf32>
    %34 = arith.addf %29, %33 : vector<16x64xf32>
    %c1_24 = arith.constant 1 : index
    %c0_25 = arith.constant 0 : index
    %35 = vector.load %arg10[%c1_24, %c0_25] : memref<18x72xf32, #tpu.memory_space<vmem>>, vector<16x64xf32>
    %36 = vector.extract_strided_slice %9 {offsets = [3, 0], sizes = [1, 64], strides = [1, 1]} : vector<9x64xf32> to vector<1x64xf32>
    %37 = vector.broadcast %36 : vector<1x64xf32> to vector<16x64xf32>
    %38 = arith.mulf %37, %35 : vector<16x64xf32>
    %39 = arith.addf %34, %38 : vector<16x64xf32>
    %c1_26 = arith.constant 1 : index
    %c4_27 = arith.constant 4 : index
    %40 = vector.load %arg10[%c1_26, %c4_27] : memref<18x72xf32, #tpu.memory_space<vmem>>, vector<16x64xf32>
    %41 = vector.extract_strided_slice %9 {offsets = [4, 0], sizes = [1, 64], strides = [1, 1]} : vector<9x64xf32> to vector<1x64xf32>
    %42 = vector.broadcast %41 : vector<1x64xf32> to vector<16x64xf32>
    %43 = arith.mulf %42, %40 : vector<16x64xf32>
    %44 = arith.addf %39, %43 : vector<16x64xf32>
    %c1_28 = arith.constant 1 : index
    %c8_29 = arith.constant 8 : index
    %45 = vector.load %arg10[%c1_28, %c8_29] : memref<18x72xf32, #tpu.memory_space<vmem>>, vector<16x64xf32>
    %46 = vector.extract_strided_slice %9 {offsets = [5, 0], sizes = [1, 64], strides = [1, 1]} : vector<9x64xf32> to vector<1x64xf32>
    %47 = vector.broadcast %46 : vector<1x64xf32> to vector<16x64xf32>
    %48 = arith.mulf %47, %45 : vector<16x64xf32>
    %49 = arith.addf %44, %48 : vector<16x64xf32>
    %c2 = arith.constant 2 : index
    %c0_30 = arith.constant 0 : index
    %50 = vector.load %arg10[%c2, %c0_30] : memref<18x72xf32, #tpu.memory_space<vmem>>, vector<16x64xf32>
    %51 = vector.extract_strided_slice %9 {offsets = [6, 0], sizes = [1, 64], strides = [1, 1]} : vector<9x64xf32> to vector<1x64xf32>
    %52 = vector.broadcast %51 : vector<1x64xf32> to vector<16x64xf32>
    %53 = arith.mulf %52, %50 : vector<16x64xf32>
    %54 = arith.addf %49, %53 : vector<16x64xf32>
    %c2_31 = arith.constant 2 : index
    %c4_32 = arith.constant 4 : index
    %55 = vector.load %arg10[%c2_31, %c4_32] : memref<18x72xf32, #tpu.memory_space<vmem>>, vector<16x64xf32>
    %56 = vector.extract_strided_slice %9 {offsets = [7, 0], sizes = [1, 64], strides = [1, 1]} : vector<9x64xf32> to vector<1x64xf32>
    %57 = vector.broadcast %56 : vector<1x64xf32> to vector<16x64xf32>
    %58 = arith.mulf %57, %55 : vector<16x64xf32>
    %59 = arith.addf %54, %58 : vector<16x64xf32>
    %c2_33 = arith.constant 2 : index
    %c8_34 = arith.constant 8 : index
    %60 = vector.load %arg10[%c2_33, %c8_34] : memref<18x72xf32, #tpu.memory_space<vmem>>, vector<16x64xf32>
    %61 = vector.extract_strided_slice %9 {offsets = [8, 0], sizes = [1, 64], strides = [1, 1]} : vector<9x64xf32> to vector<1x64xf32>
    %62 = vector.broadcast %61 : vector<1x64xf32> to vector<16x64xf32>
    %63 = arith.mulf %62, %60 : vector<16x64xf32>
    %64 = arith.addf %59, %63 : vector<16x64xf32>
    %c0_35 = arith.constant 0 : index
    %c0_36 = arith.constant 0 : index
    %65 = vector.load %arg6[%c0_35, %c0_36] : memref<64x128xf32, #tpu.memory_space<vmem>>, vector<64x128xf32>
    %cst_37 = arith.constant dense<0.000000e+00> : vector<16x128xf32>
    %66 = tpu.matmul %64, %65, %cst_37 {dimension_numbers = #tpu.dot_dimension_numbers<[1], [0], [0], [1], [0, 0, 1, 1], [], []>} : vector<16x64xf32>, vector<64x128xf32>, vector<16x128xf32> -> vector<16x128xf32>
    %c0_38 = arith.constant 0 : index
    %c0_39 = arith.constant 0 : index
    %67 = vector.load %arg7[%c0_38, %c0_39] : memref<1x128xf32, #tpu.memory_space<vmem>>, vector<1x128xf32>
    %68 = vector.broadcast %67 : vector<1x128xf32> to vector<16x128xf32>
    %69 = arith.addf %66, %68 : vector<16x128xf32>
    %cst_40 = arith.constant 0.000000e+00 : f32
    %70 = vector.broadcast %cst_40 : f32 to vector<16x128xf32>
    %71 = arith.maximumf %69, %70 : vector<16x128xf32>
    %c0_41 = arith.constant 0 : index
    %c0_42 = arith.constant 0 : index
    %72 = vector.load %arg8[%c0_41, %c0_42] : memref<128x128xf32, #tpu.memory_space<vmem>>, vector<128x128xf32>
    %cst_43 = arith.constant dense<0.000000e+00> : vector<16x128xf32>
    %73 = tpu.matmul %1, %72, %cst_43 {dimension_numbers = #tpu.dot_dimension_numbers<[1], [0], [0], [1], [0, 0, 1, 1], [], []>} : vector<16x128xf32>, vector<128x128xf32>, vector<16x128xf32> -> vector<16x128xf32>
    %74 = arith.addf %71, %73 : vector<16x128xf32>
    %c0_44 = arith.constant 0 : index
    %c0_45 = arith.constant 0 : index
    %c0_46 = arith.constant 0 : index
    %75 = vector.load %arg9[%c0_44, %c0_45, %c0_46] : memref<1x16x128xf32, #tpu.memory_space<vmem>>, vector<1x16x128xf32>
    %76 = vector.shape_cast %75 : vector<1x16x128xf32> to vector<16x128xf32>
    %77 = vector.shape_cast %74 : vector<16x128xf32> to vector<1x16x128xf32>
    tpu.vector_store %arg9[%c0_44, %c0_45, %c0_46], %77 {strides = array<i32>} : memref<1x16x128xf32, #tpu.memory_space<vmem>>, vector<1x16x128xf32>,
    return
  }
  func.func @transform_0(%arg0: i32) -> (i32, i32, i32) {
    %c0_i32 = arith.constant 0 : i32
    %c0_i32_0 = arith.constant 0 : i32
    %c0_i32_1 = arith.constant 0 : i32
    return %arg0, %c0_i32, %c0_i32_0 : i32, i32, i32
  }
  func.func @transform_1(%arg0: i32) -> (i32, i32) {
    %c0_i32 = arith.constant 0 : i32
    %c0_i32_0 = arith.constant 0 : i32
    %c0_i32_1 = arith.constant 0 : i32
    return %c0_i32, %c0_i32_0 : i32, i32
  }
  func.func @transform_2(%arg0: i32) -> (i32, i32) {
    %c0_i32 = arith.constant 0 : i32
    %c0_i32_0 = arith.constant 0 : i32
    %c0_i32_1 = arith.constant 0 : i32
    return %c0_i32, %c0_i32_0 : i32, i32
  }
  func.func @transform_3(%arg0: i32) -> (i32, i32) {
    %c0_i32 = arith.constant 0 : i32
    %c0_i32_0 = arith.constant 0 : i32
    %c0_i32_1 = arith.constant 0 : i32
    return %c0_i32, %c0_i32_0 : i32, i32
  }
  func.func @transform_4(%arg0: i32) -> (i32, i32) {
    %c0_i32 = arith.constant 0 : i32
    %c0_i32_0 = arith.constant 0 : i32
    %c0_i32_1 = arith.constant 0 : i32
    return %c0_i32, %c0_i32_0 : i32, i32
  }
  func.func @transform_5(%arg0: i32) -> (i32, i32) {
    %c0_i32 = arith.constant 0 : i32
    %c0_i32_0 = arith.constant 0 : i32
    %c0_i32_1 = arith.constant 0 : i32
    return %c0_i32, %c0_i32_0 : i32, i32
  }
  func.func @transform_6(%arg0: i32) -> (i32, i32) {
    %c0_i32 = arith.constant 0 : i32
    %c0_i32_0 = arith.constant 0 : i32
    %c0_i32_1 = arith.constant 0 : i32
    return %c0_i32, %c0_i32_0 : i32, i32
  }
  func.func @transform_7(%arg0: i32) -> (i32, i32) {
    %c0_i32 = arith.constant 0 : i32
    %c0_i32_0 = arith.constant 0 : i32
    %c0_i32_1 = arith.constant 0 : i32
    return %c0_i32, %c0_i32_0 : i32, i32
  }
  func.func @transform_8(%arg0: i32) -> (i32, i32, i32) {
    %c0_i32 = arith.constant 0 : i32
    %c0_i32_0 = arith.constant 0 : i32
    %c0_i32_1 = arith.constant 0 : i32
    return %arg0, %c0_i32, %c0_i32_0 : i32, i32, i32
  }
}

</mosaic_0001>

<llo_original>
// kernel: tile.23
$region0: #{tile.23}
  #allocation0 [shape = 's32[1]{0}', space=sflag, size = 0x4, scoped, tag = 'scoped memory for tile.23']
  %s0 = inlined_call_operand.vmem [shape: f32[8], index: 0, kind: input, shape index: {}]
  %s1 = inlined_call_operand.vmem [shape: f32[16,8], index: 1, kind: output, shape index: {}]
  // Predicated region
  $region2: #{tile.23} parent=0 // pred_check
    _
  $region3: #{tile.23} parent=0 // pred_check_branch
    %3 = sbr.rel (0) target = $region5
  $region4: #{tile.23} parent=0 // pred_region
    _
  $region5: #{tile.23} parent=0 // pred_fallthru
    _
  %v4 = vld [vmem:[%s0] ss:$0 sm:$0xff]
  %5 = vst [vmem:[%s1] sm:$0xff] %v4
  %s6 = scalar_lea.vmem %s1, 8
  %7 = vst [vmem:[%s6] sm:$0xff] %v4

// kernel: tile.24
$region0: #{tile.24}
  %s0 = inlined_call_operand.vmem [shape: f32[16,8], index: 0, kind: input, shape index: {}]
  %s1 = inlined_call_operand.vmem [shape: f32[1,128], index: 1, kind: output, shape index: {}]
  $region1: #{tile.24} parent=0
    #allocation0 [shape = 'u8[4096]{0}', space=vmem, size = 0x1000, scoped, tag = 'scoped mem for output reshape']
    %v2 = vld [vmem:[%s0] sm:$0x1]
    %vm3 = vcmask 64512
    %4 = vst.msk [vmem:[#allocation0] sm:$0x1] %vm3, %v2
    %s5 = scalar_lea.vmem %s0, 15
    %v6 = vld [vmem:[%s5] sm:$0x1]
    %7 = vrot.lane.b32.xlu0 %v6, 120
    %v8 = vpop.permute.xlu0 %7
    %vm9 = vcmask 1048512
    %10 = vst.msk [vmem:[#allocation0] sm:$0x1] %vm9, %v8
    %s11 = scalar_lea.vmem %s0, 14
    %v12 = vld [vmem:[%s11] sm:$0x1]
    %13 = vrot.lane.b32.xlu0 %v12, 112
    %v14 = vpop.permute.xlu0 %13
    %vm15 = vcmask 982912
    %16 = vst.msk [vmem:[#allocation0] sm:$0x1] %vm15, %v14
    %s17 = scalar_lea.vmem %s0, 13
    %v18 = vld [vmem:[%s17] sm:$0x1]
    %19 = vrot.lane.b32.xlu0 %v18, 104
    %v20 = vpop.permute.xlu0 %19
    %vm21 = vcmask 917312
    %22 = vst.msk [vmem:[#allocation0] sm:$0x1] %vm21, %v20
    %s23 = scalar_lea.vmem %s0, 12
    %v24 = vld [vmem:[%s23] sm:$0x1]
    %25 = vrot.lane.b32.xlu0 %v24, 96
    %v26 = vpop.permute.xlu0 %25
    %vm27 = vcmask 851712
    %28 = vst.msk [vmem:[#allocation0] sm:$0x1] %vm27, %v26
    %s29 = scalar_lea.vmem %s0, 11
    %v30 = vld [vmem:[%s29] sm:$0x1]
    %31 = vrot.lane.b32.xlu0 %v30, 88
    %v32 = vpop.permute.xlu0 %31
    %vm33 = vcmask 786112
    %34 = vst.msk [vmem:[#allocation0] sm:$0x1] %vm33, %v32
    %s35 = scalar_lea.vmem %s0, 10
    %v36 = vld [vmem:[%s35] sm:$0x1]
    %37 = vrot.lane.b32.xlu0 %v36, 80
    %v38 = vpop.permute.xlu0 %37
    %vm39 = vcmask 720512
    %40 = vst.msk [vmem:[#allocation0] sm:$0x1] %vm39, %v38
    %s41 = scalar_lea.vmem %s0, 9
    %v42 = vld [vmem:[%s41] sm:$0x1]
    %43 = vrot.lane.b32.xlu0 %v42, 72
    %v44 = vpop.permute.xlu0 %43
    %vm45 = vcmask 654912
    %46 = vst.msk [vmem:[#allocation0] sm:$0x1] %vm45, %v44
    %s47 = scalar_lea.vmem %s0, 8
    %v48 = vld [vmem:[%s47] sm:$0x1]
    %49 = vrot.lane.b32.xlu0 %v48, 64
    %v50 = vpop.permute.xlu0 %49
    %vm51 = vcmask 589312
    %52 = vst.msk [vmem:[#allocation0] sm:$0x1] %vm51, %v50
    %s53 = scalar_lea.vmem %s0, 7
    %v54 = vld [vmem:[%s53] sm:$0x1]
    %55 = vrot.lane.b32.xlu0 %v54, 56
    %v56 = vpop.permute.xlu0 %55
    %vm57 = vcmask 523712
    %58 = vst.msk [vmem:[#allocation0] sm:$0x1] %vm57, %v56
    %s59 = scalar_lea.vmem %s0, 6
    %v60 = vld [vmem:[%s59] sm:$0x1]
    %61 = vrot.lane.b32.xlu0 %v60, 48
    %v62 = vpop.permute.xlu0 %61
    %vm63 = vcmask 458112
    %64 = vst.msk [vmem:[#allocation0] sm:$0x1] %vm63, %v62
    %s65 = scalar_lea.vmem %s0, 5
    %v66 = vld [vmem:[%s65] sm:$0x1]
    %67 = vrot.lane.b32.xlu0 %v66, 40
    %v68 = vpop.permute.xlu0 %67
    %vm69 = vcmask 392512
    %70 = vst.msk [vmem:[#allocation0] sm:$0x1] %vm69, %v68
    %s71 = scalar_lea.vmem %s0, 4
    %v72 = vld [vmem:[%s71] sm:$0x1]
    %73 = vrot.lane.b32.xlu0 %v72, 32
    %v74 = vpop.permute.xlu0 %73
    %vm75 = vcmask 326912
    %76 = vst.msk [vmem:[#allocation0] sm:$0x1] %vm75, %v74
    %s77 = scalar_lea.vmem %s0, 3
    %v78 = vld [vmem:[%s77] sm:$0x1]
    %79 = vrot.lane.b32.xlu0 %v78, 24
    %v80 = vpop.permute.xlu0 %79
    %vm81 = vcmask 261312
    %82 = vst.msk [vmem:[#allocation0] sm:$0x1] %vm81, %v80
    %s83 = scalar_lea.vmem %s0, 2
    %v84 = vld [vmem:[%s83] sm:$0x1]
    %85 = vrot.lane.b32.xlu0 %v84, 16
    %v86 = vpop.permute.xlu0 %85
    %vm87 = vcmask 195712
    %88 = vst.msk [vmem:[#allocation0] sm:$0x1] %vm87, %v86
    %s89 = scalar_lea.vmem %s0, 1
    %v90 = vld [vmem:[%s89] sm:$0x1]
    %91 = vrot.lane.b32.xlu0 %v90, 8
    %v92 = vpop.permute.xlu0 %91
    %vm93 = vcmask 130112
    %94 = vst.msk [vmem:[#allocation0] sm:$0x1] %vm93, %v92
    %s96 = sshllo.u32 0, 1
    %v98 = vld [vmem:[#allocation0] sm:%s96]
    %s99 = sshllo.u32 0, 1
    %100 = vst [vmem:[%s1] sm:%s99] %v98

// kernel: tile.28
$region0: #{tile.28}
  #allocation0 [shape = 's32[1]{0}', space=sflag, size = 0x4, scoped, tag = 'scoped memory for tile.28']
  %s0 = inlined_call_operand.vmem [shape: f32[4], index: 0, kind: input, shape index: {}]
  %s1 = inlined_call_operand.vmem [shape: f32[16,4], index: 1, kind: output, shape index: {}]
  // Predicated region
  $region2: #{tile.28} parent=0 // pred_check
    _
  $region3: #{tile.28} parent=0 // pred_check_branch
    %3 = sbr.rel (0) target = $region5
  $region4: #{tile.28} parent=0 // pred_region
    _
  $region5: #{tile.28} parent=0 // pred_fallthru
    _
  %v4 = vld [vmem:[%s0] ss:$0 sm:$0xff]
  %5 = vst [vmem:[%s1] sm:$0xff] %v4
  %s6 = scalar_lea.vmem %s1, 8
  %7 = vst [vmem:[%s6] sm:$0xff] %v4

// kernel: tile.29
$region0: #{tile.29}
  %s0 = inlined_call_operand.vmem [shape: f32[16,4], index: 0, kind: input, shape index: {}]
  %s1 = inlined_call_operand.vmem [shape: f32[1,64], index: 1, kind: output, shape index: {}]
  $region1: #{tile.29} parent=0
    #allocation0 [shape = 'u8[4096]{0}', space=vmem, size = 0x1000, scoped, tag = 'scoped mem for output reshape']
    %v2 = vld [vmem:[%s0] sm:$0x1]
    %vm3 = vcmask 31744
    %4 = vst.msk [vmem:[#allocation0] sm:$0x1] %vm3, %v2
    %s5 = scalar_lea.vmem %s0, 15
    %v6 = vld [vmem:[%s5] sm:$0x1]
    %7 = vrot.lane.b32.xlu0 %v6, 60
    %v8 = vpop.permute.xlu0 %7
    %vm9 = vcmask 523744
    %10 = vst.msk [vmem:[#allocation0] sm:$0x1] %vm9, %v8
    %s11 = scalar_lea.vmem %s0, 14
    %v12 = vld [vmem:[%s11] sm:$0x1]
    %13 = vrot.lane.b32.xlu0 %v12, 56
    %v14 = vpop.permute.xlu0 %13
    %vm15 = vcmask 490944
    %16 = vst.msk [vmem:[#allocation0] sm:$0x1] %vm15, %v14
    %s17 = scalar_lea.vmem %s0, 13
    %v18 = vld [vmem:[%s17] sm:$0x1]
    %19 = vrot.lane.b32.xlu0 %v18, 52
    %v20 = vpop.permute.xlu0 %19
    %vm21 = vcmask 458144
    %22 = vst.msk [vmem:[#allocation0] sm:$0x1] %vm21, %v20
    %s23 = scalar_lea.vmem %s0, 12
    %v24 = vld [vmem:[%s23] sm:$0x1]
    %25 = vrot.lane.b32.xlu0 %v24, 48
    %v26 = vpop.permute.xlu0 %25
    %vm27 = vcmask 425344
    %28 = vst.msk [vmem:[#allocation0] sm:$0x1] %vm27, %v26
    %s29 = scalar_lea.vmem %s0, 11
    %v30 = vld [vmem:[%s29] sm:$0x1]
    %31 = vrot.lane.b32.xlu0 %v30, 44
    %v32 = vpop.permute.xlu0 %31
    %vm33 = vcmask 392544
    %34 = vst.msk [vmem:[#allocation0] sm:$0x1] %vm33, %v32
    %s35 = scalar_lea.vmem %s0, 10
    %v36 = vld [vmem:[%s35] sm:$0x1]
    %37 = vrot.lane.b32.xlu0 %v36, 40
    %v38 = vpop.permute.xlu0 %37
    %vm39 = vcmask 359744
    %40 = vst.msk [vmem:[#allocation0] sm:$0x1] %vm39, %v38
    %s41 = scalar_lea.vmem %s0, 9
    %v42 = vld [vmem:[%s41] sm:$0x1]
    %43 = vrot.lane.b32.xlu0 %v42, 36
    %v44 = vpop.permute.xlu0 %43
    %vm45 = vcmask 326944
    %46 = vst.msk [vmem:[#allocation0] sm:$0x1] %vm45, %v44
    %s47 = scalar_lea.vmem %s0, 8
    %v48 = vld [vmem:[%s47] sm:$0x1]
    %49 = vrot.lane.b32.xlu0 %v48, 32
    %v50 = vpop.permute.xlu0 %49
    %vm51 = vcmask 294144
    %52 = vst.msk [vmem:[#allocation0] sm:$0x1] %vm51, %v50
    %s53 = scalar_lea.vmem %s0, 7
    %v54 = vld [vmem:[%s53] sm:$0x1]
    %55 = vrot.lane.b32.xlu0 %v54, 28
    %v56 = vpop.permute.xlu0 %55
    %vm57 = vcmask 261344
    %58 = vst.msk [vmem:[#allocation0] sm:$0x1] %vm57, %v56
    %s59 = scalar_lea.vmem %s0, 6
    %v60 = vld [vmem:[%s59] sm:$0x1]
    %61 = vrot.lane.b32.xlu0 %v60, 24
    %v62 = vpop.permute.xlu0 %61
    %vm63 = vcmask 228544
    %64 = vst.msk [vmem:[#allocation0] sm:$0x1] %vm63, %v62
    %s65 = scalar_lea.vmem %s0, 5
    %v66 = vld [vmem:[%s65] sm:$0x1]
    %67 = vrot.lane.b32.xlu0 %v66, 20
    %v68 = vpop.permute.xlu0 %67
    %vm69 = vcmask 195744
    %70 = vst.msk [vmem:[#allocation0] sm:$0x1] %vm69, %v68
    %s71 = scalar_lea.vmem %s0, 4
    %v72 = vld [vmem:[%s71] sm:$0x1]
    %73 = vrot.lane.b32.xlu0 %v72, 16
    %v74 = vpop.permute.xlu0 %73
    %vm75 = vcmask 162944
    %76 = vst.msk [vmem:[#allocation0] sm:$0x1] %vm75, %v74
    %s77 = scalar_lea.vmem %s0, 3
    %v78 = vld [vmem:[%s77] sm:$0x1]
    %79 = vrot.lane.b32.xlu0 %v78, 12
    %v80 = vpop.permute.xlu0 %79
    %vm81 = vcmask 130144
    %82 = vst.msk [vmem:[#allocation0] sm:$0x1] %vm81, %v80
    %s83 = scalar_lea.vmem %s0, 2
    %v84 = vld [vmem:[%s83] sm:$0x1]
    %85 = vrot.lane.b32.xlu0 %v84, 8
    %v86 = vpop.permute.xlu0 %85
    %vm87 = vcmask 97344
    %88 = vst.msk [vmem:[#allocation0] sm:$0x1] %vm87, %v86
    %s89 = scalar_lea.vmem %s0, 1
    %v90 = vld [vmem:[%s89] sm:$0x1]
    %91 = vrot.lane.b32.xlu0 %v90, 4
    %v92 = vpop.permute.xlu0 %91
    %vm93 = vcmask 64544
    %94 = vst.msk [vmem:[#allocation0] sm:$0x1] %vm93, %v92
    %s96 = sshllo.u32 0, 1
    %v98 = vld [vmem:[#allocation0] sm:%s96]
    %s99 = sshllo.u32 0, 1
    %100 = vst [vmem:[%s1] sm:%s99] %v98

// kernel: _inverted_residual_forward_impl.1
$region0: #{_inverted_residual_forward_impl.1}
  #allocation0 [shape = 'u32[]', space=smem, size = 0x4, offset = 0x4, fixed_abs, tag = 'smem constant byte address 0x4 - core index']
  #allocation1 [shape = 'u32[144,128]{1,0:T(1,128)}', space=vmem, size = 0x12000, scoped, tag = 'internal scratch']
  #allocation2 [shape = 'f32[18,72]{1,0:T(8,128)}', space=vmem, size = 0x3000, scoped, tag = 'scratch operand']
  %s0 = inlined_call_operand.vmem [shape: f32[2,16,128], index: 0, kind: input, shape index: {}]
  %s1 = inlined_call_operand.vmem [shape: f32[128,64], index: 1, kind: input, shape index: {}]
  %s2 = inlined_call_operand.vmem [shape: f32[1,64], index: 2, kind: input, shape index: {}]
  %s3 = inlined_call_operand.vmem [shape: f32[9,64], index: 3, kind: input, shape index: {}]
  %s4 = inlined_call_operand.vmem [shape: f32[1,64], index: 4, kind: input, shape index: {}]
  %s5 = inlined_call_operand.vmem [shape: f32[64,128], index: 5, kind: input, shape index: {}]
  %s6 = inlined_call_operand.vmem [shape: f32[1,128], index: 6, kind: input, shape index: {}]
  %s7 = inlined_call_operand.vmem [shape: f32[128,128], index: 7, kind: input, shape index: {}]
  %s8 = inlined_call_operand.vmem [shape: f32[2,16,128], index: 8, kind: output, shape index: {}]
  %s9 = sld [smem:[#allocation0]]
  $region65: #{_inverted_residual_forward_impl.1} parent=0
    _
  %s11 = ssub.s32 1, %s9
  %s12 = scalar_select 0, %s11, %s9
  loop: start=0, step=1, limit=4
  $region2: #{_inverted_residual_forward_impl.1} parent=0 // loop_pre_header
    _
  $region3: #{_inverted_residual_forward_impl.1} parent=0 // loop_header
    %s14 = sphi 0, %s18
    %p15 = scmp.ge.s32.totalorder %s14, 4
    %s24 = sphi 0, %s26
    %s27 = sphi 0, %s24
    %s28 = sphi 0, %s27
    %s44 = sphi 0, %s28
    %s48 = sphi 0, %s48
    %s50 = sphi 0, %s48
    %s51 = sphi 0, %s50
    %s65 = sphi 0, %s51
    %s69 = sphi 0, %s69
    %s71 = sphi 0, %s69
    %s72 = sphi 0, %s71
    %s86 = sphi 0, %s72
    %s90 = sphi 0, %s90
    %s92 = sphi 0, %s90
    %s93 = sphi 0, %s92
    %s107 = sphi 0, %s93
    %s111 = sphi 0, %s111
    %s113 = sphi 0, %s111
    %s114 = sphi 0, %s113
    %s128 = sphi 0, %s114
    %s132 = sphi 0, %s132
    %s134 = sphi 0, %s132
    %s135 = sphi 0, %s134
    %s149 = sphi 0, %s135
    %s153 = sphi 0, %s153
    %s155 = sphi 0, %s153
    %s156 = sphi 0, %s155
    %s170 = sphi 0, %s156
    %s174 = sphi 0, %s174
    %s176 = sphi 0, %s174
    %s177 = sphi 0, %s176
    %s191 = sphi 0, %s177
    %s197 = sphi 0, %s199
    %s200 = sphi 0, %s197
    %s201 = sphi 0, %s200
    %s217 = sphi 0, %s201
  $region4: #{_inverted_residual_forward_impl.1} parent=0 // loop_header_branch
    %17 = sbr.rel (%p15) target = $region8
  $region5: #{_inverted_residual_forward_impl.1} parent=0 // loop_body
    %s19 = ssub.s32 %s14, 1
    %s20 = ssub.s32 %s14, 2
    %s21 = sadd.s32 %s14, 1
    %s22 = ssub.s32 %s14, %s21
    %p23 = scmp.eq.s32.totalorder %s22, 0
    %s25 = sadd.s32 %s24, 1
    %s26 = scalar_select %p23, %s24, %s25
    %p29 = pneg %p23
    %p30 = scmp.eq.s32.totalorder %s14, 1
    %p31 = por %p29, %p30
    %p32 = scmp.ne.s32.totalorder %s24, %s27
    %p33 = scmp.eq.s32.totalorder %s14, 0
    %p34 = por %p32, %p33
    %p35 = scmp.ne.s32.totalorder %s24, %s27
    %p36 = scmp.eq.s32.totalorder %s19, 1
    %p37 = por %p35, %p36
    %p38 = scmp.ne.s32.totalorder %s27, %s28
    %p39 = scmp.eq.s32.totalorder %s19, 0
    %p40 = por %p38, %p39
    %p41 = scmp.ne.s32.totalorder %s27, %s28
    %p42 = scmp.eq.s32.totalorder %s20, 1
    %p43 = por %p41, %p42
    %p45 = scmp.ne.s32.totalorder %s28, %s44
    %p46 = scmp.eq.s32.totalorder %s20, 0
    %p47 = por %p45, %p46
    %s49 = sadd.s32 %s48, 1
    %p52 = scmp.eq.s32.totalorder %s14, 1
    %p53 = scmp.ne.s32.totalorder %s48, %s50
    %p54 = scmp.eq.s32.totalorder %s14, 0
    %p55 = por %p53, %p54
    %p56 = scmp.ne.s32.totalorder %s48, %s50
    %p57 = scmp.eq.s32.totalorder %s19, 1
    %p58 = por %p56, %p57
    %p59 = scmp.ne.s32.totalorder %s50, %s51
    %p60 = scmp.eq.s32.totalorder %s19, 0
    %p61 = por %p59, %p60
    %p62 = scmp.ne.s32.totalorder %s50, %s51
    %p63 = scmp.eq.s32.totalorder %s20, 1
    %p64 = por %p62, %p63
    %p66 = scmp.ne.s32.totalorder %s51, %s65
    %p67 = scmp.eq.s32.totalorder %s20, 0
    %p68 = por %p66, %p67
    %s70 = sadd.s32 %s69, 1
    %p73 = scmp.eq.s32.totalorder %s14, 1
    %p74 = scmp.ne.s32.totalorder %s69, %s71
    %p75 = scmp.eq.s32.totalorder %s14, 0
    %p76 = por %p74, %p75
    %p77 = scmp.ne.s32.totalorder %s69, %s71
    %p78 = scmp.eq.s32.totalorder %s19, 1
    %p79 = por %p77, %p78
    %p80 = scmp.ne.s32.totalorder %s71, %s72
    %p81 = scmp.eq.s32.totalorder %s19, 0
    %p82 = por %p80, %p81
    %p83 = scmp.ne.s32.totalorder %s71, %s72
    %p84 = scmp.eq.s32.totalorder %s20, 1
    %p85 = por %p83, %p84
    %p87 = scmp.ne.s32.totalorder %s72, %s86
    %p88 = scmp.eq.s32.totalorder %s20, 0
    %p89 = por %p87, %p88
    %s91 = sadd.s32 %s90, 1
    %p94 = scmp.eq.s32.totalorder %s14, 1
    %p95 = scmp.ne.s32.totalorder %s90, %s92
    %p96 = scmp.eq.s32.totalorder %s14, 0
    %p97 = por %p95, %p96
    %p98 = scmp.ne.s32.totalorder %s90, %s92
    %p99 = scmp.eq.s32.totalorder %s19, 1
    %p100 = por %p98, %p99
    %p101 = scmp.ne.s32.totalorder %s92, %s93
    %p102 = scmp.eq.s32.totalorder %s19, 0
    %p103 = por %p101, %p102
    %p104 = scmp.ne.s32.totalorder %s92, %s93
    %p105 = scmp.eq.s32.totalorder %s20, 1
    %p106 = por %p104, %p105
    %p108 = scmp.ne.s32.totalorder %s93, %s107
    %p109 = scmp.eq.s32.totalorder %s20, 0
    %p110 = por %p108, %p109
    %s112 = sadd.s32 %s111, 1
    %p115 = scmp.eq.s32.totalorder %s14, 1
    %p116 = scmp.ne.s32.totalorder %s111, %s113
    %p117 = scmp.eq.s32.totalorder %s14, 0
    %p118 = por %p116, %p117
    %p119 = scmp.ne.s32.totalorder %s111, %s113
    %p120 = scmp.eq.s32.totalorder %s19, 1
    %p121 = por %p119, %p120
    %p122 = scmp.ne.s32.totalorder %s113, %s114
    %p123 = scmp.eq.s32.totalorder %s19, 0
    %p124 = por %p122, %p123
    %p125 = scmp.ne.s32.totalorder %s113, %s114
    %p126 = scmp.eq.s32.totalorder %s20, 1
    %p127 = por %p125, %p126
    %p129 = scmp.ne.s32.totalorder %s114, %s128
    %p130 = scmp.eq.s32.totalorder %s20, 0
    %p131 = por %p129, %p130
    %s133 = sadd.s32 %s132, 1
    %p136 = scmp.eq.s32.totalorder %s14, 1
    %p137 = scmp.ne.s32.totalorder %s132, %s134
    %p138 = scmp.eq.s32.totalorder %s14, 0
    %p139 = por %p137, %p138
    %p140 = scmp.ne.s32.totalorder %s132, %s134
    %p141 = scmp.eq.s32.totalorder %s19, 1
    %p142 = por %p140, %p141
    %p143 = scmp.ne.s32.totalorder %s134, %s135
    %p144 = scmp.eq.s32.totalorder %s19, 0
    %p145 = por %p143, %p144
    %p146 = scmp.ne.s32.totalorder %s134, %s135
    %p147 = scmp.eq.s32.totalorder %s20, 1
    %p148 = por %p146, %p147
    %p150 = scmp.ne.s32.totalorder %s135, %s149
    %p151 = scmp.eq.s32.totalorder %s20, 0
    %p152 = por %p150, %p151
    %s154 = sadd.s32 %s153, 1
    %p157 = scmp.eq.s32.totalorder %s14, 1
    %p158 = scmp.ne.s32.totalorder %s153, %s155
    %p159 = scmp.eq.s32.totalorder %s14, 0
    %p160 = por %p158, %p159
    %p161 = scmp.ne.s32.totalorder %s153, %s155
    %p162 = scmp.eq.s32.totalorder %s19, 1
    %p163 = por %p161, %p162
    %p164 = scmp.ne.s32.totalorder %s155, %s156
    %p165 = scmp.eq.s32.totalorder %s19, 0
    %p166 = por %p164, %p165
    %p167 = scmp.ne.s32.totalorder %s155, %s156
    %p168 = scmp.eq.s32.totalorder %s20, 1
    %p169 = por %p167, %p168
    %p171 = scmp.ne.s32.totalorder %s156, %s170
    %p172 = scmp.eq.s32.totalorder %s20, 0
    %p173 = por %p171, %p172
    %s175 = sadd.s32 %s174, 1
    %p178 = scmp.eq.s32.totalorder %s14, 1
    %p179 = scmp.ne.s32.totalorder %s174, %s176
    %p180 = scmp.eq.s32.totalorder %s14, 0
    %p181 = por %p179, %p180
    %p182 = scmp.ne.s32.totalorder %s174, %s176
    %p183 = scmp.eq.s32.totalorder %s19, 1
    %p184 = por %p182, %p183
    %p185 = scmp.ne.s32.totalorder %s176, %s177
    %p186 = scmp.eq.s32.totalorder %s19, 0
    %p187 = por %p185, %p186
    %p188 = scmp.ne.s32.totalorder %s176, %s177
    %p189 = scmp.eq.s32.totalorder %s20, 1
    %p190 = por %p188, %p189
    %p192 = scmp.ne.s32.totalorder %s177, %s191
    %p193 = scmp.eq.s32.totalorder %s20, 0
    %p194 = por %p192, %p193
    %s195 = ssub.s32 %s14, %s21
    %p196 = scmp.eq.s32.totalorder %s195, 0
    %s198 = sadd.s32 %s197, 1
    %s199 = scalar_select %p196, %s197, %s198
    %p202 = pneg %p196
    %p203 = scmp.eq.s32.totalorder %s14, 1
    %p204 = por %p202, %p203
    %p205 = scmp.ne.s32.totalorder %s197, %s200
    %p206 = scmp.eq.s32.totalorder %s14, 0
    %p207 = por %p205, %p206
    %p208 = scmp.ne.s32.totalorder %s197, %s200
    %p209 = scmp.eq.s32.totalorder %s19, 1
    %p210 = por %p208, %p209
    %p211 = scmp.ne.s32.totalorder %s200, %s201
    %p212 = scmp.eq.s32.totalorder %s19, 0
    %p213 = por %p211, %p212
    %p214 = scmp.ne.s32.totalorder %s200, %s201
    %p215 = scmp.eq.s32.totalorder %s20, 1
    %p216 = por %p214, %p215
    %p218 = scmp.ne.s32.totalorder %s201, %s217
    %p219 = scmp.eq.s32.totalorder %s20, 0
    %p220 = por %p218, %p219
    %p221 = scmp.le.s32.totalorder 1, %s14
    %p222 = scmp.lt.s32.totalorder %s14, 3
    %p223 = pnand %p221, %p222
    %p224 = pneg %p223
    // Predicated region
    $region9: #{_inverted_residual_forward_impl.1} parent=5 // pred_check
      _
    $region10: #{_inverted_residual_forward_impl.1} parent=5 // pred_check_branch
      %226 = sbr.rel (%p223) target = $region12
    $region11: #{_inverted_residual_forward_impl.1} parent=5 // pred_region
      %s227 = ssub.s32 %s14, 1
      // Predicated region
      $region13: #{_inverted_residual_forward_impl.1} parent=11 // pred_check
        %p228 = pneg %p61
      $region14: #{_inverted_residual_forward_impl.1} parent=11 // pred_check_branch
        %230 = sbr.rel (%p228) target = $region16
      $region15: #{_inverted_residual_forward_impl.1} parent=11 // pred_region
        _
      $region16: #{_inverted_residual_forward_impl.1} parent=11 // pred_fallthru
        _
      // Predicated region
      $region17: #{_inverted_residual_forward_impl.1} parent=11 // pred_check
        %p231 = pneg %p82
      $region18: #{_inverted_residual_forward_impl.1} parent=11 // pred_check_branch
        %233 = sbr.rel (%p231) target = $region20
      $region19: #{_inverted_residual_forward_impl.1} parent=11 // pred_region
        _
      $region20: #{_inverted_residual_forward_impl.1} parent=11 // pred_fallthru
        _
      // Predicated region
      $region21: #{_inverted_residual_forward_impl.1} parent=11 // pred_check
        %p234 = pneg %p103
      $region22: #{_inverted_residual_forward_impl.1} parent=11 // pred_check_branch
        %236 = sbr.rel (%p234) target = $region24
      $region23: #{_inverted_residual_forward_impl.1} parent=11 // pred_region
        _
      $region24: #{_inverted_residual_forward_impl.1} parent=11 // pred_fallthru
        _
      // Predicated region
      $region25: #{_inverted_residual_forward_impl.1} parent=11 // pred_check
        %p237 = pneg %p124
      $region26: #{_inverted_residual_forward_impl.1} parent=11 // pred_check_branch
        %239 = sbr.rel (%p237) target = $region28
      $region27: #{_inverted_residual_forward_impl.1} parent=11 // pred_region
        _
      $region28: #{_inverted_residual_forward_impl.1} parent=11 // pred_fallthru
        _
      // Predicated region
      $region29: #{_inverted_residual_forward_impl.1} parent=11 // pred_check
        %p240 = pneg %p145
      $region30: #{_inverted_residual_forward_impl.1} parent=11 // pred_check_branch
        %242 = sbr.rel (%p240) target = $region32
      $region31: #{_inverted_residual_forward_impl.1} parent=11 // pred_region
        _
      $region32: #{_inverted_residual_forward_impl.1} parent=11 // pred_fallthru
        _
      // Predicated region
      $region33: #{_inverted_residual_forward_impl.1} parent=11 // pred_check
        %p243 = pneg %p166
      $region34: #{_inverted_residual_forward_impl.1} parent=11 // pred_check_branch
        %245 = sbr.rel (%p243) target = $region36
      $region35: #{_inverted_residual_forward_impl.1} parent=11 // pred_region
        _
      $region36: #{_inverted_residual_forward_impl.1} parent=11 // pred_fallthru
        _
      // Predicated region
      $region37: #{_inverted_residual_forward_impl.1} parent=11 // pred_check
        %p246 = pneg %p187
      $region38: #{_inverted_residual_forward_impl.1} parent=11 // pred_check_branch
        %248 = sbr.rel (%p246) target = $region40
      $region39: #{_inverted_residual_forward_impl.1} parent=11 // pred_region
        _
      $region40: #{_inverted_residual_forward_impl.1} parent=11 // pred_fallthru
        _
    $region12: #{_inverted_residual_forward_impl.1} parent=5 // pred_fallthru
      _
    %p249 = scmp.lt.s32.totalorder %s14, 2
    // Predicated region
    $region41: #{_inverted_residual_forward_impl.1} parent=5 // pred_check
      %p250 = pneg %p249
    $region42: #{_inverted_residual_forward_impl.1} parent=5 // pred_check_branch
      %252 = sbr.rel (%p250) target = $region44
    $region43: #{_inverted_residual_forward_impl.1} parent=5 // pred_region
      // Predicated region
      $region45: #{_inverted_residual_forward_impl.1} parent=43 // pred_check
        %p253 = pneg %p34
      $region46: #{_inverted_residual_forward_impl.1} parent=43 // pred_check_branch
        %255 = sbr.rel (%p253) target = $region48
      $region47: #{_inverted_residual_forward_impl.1} parent=43 // pred_region
        %p256 = scmp.lt.s32.totalorder %s14, 1
        %s257 = scalar_select %p256, %s14, 1
        %s258 = smul.addr %s257, 2
        %s259 = smul.addr %s258, 8
        %s260 = scalar_lea.vmem %s0, %s259
      $region48: #{_inverted_residual_forward_impl.1} parent=43 // pred_fallthru
        _
    $region44: #{_inverted_residual_forward_impl.1} parent=5 // pred_fallthru
      _
    %p261 = scmp.le.s32.totalorder 1, %s14
    %p262 = scmp.lt.s32.totalorder %s14, 3
    %p263 = pnand %p261, %p262
    %p264 = pneg %p263
    // Predicated region
    $region49: #{_inverted_residual_forward_impl.1} parent=5 // pred_check
      _
    $region50: #{_inverted_residual_forward_impl.1} parent=5 // pred_check_branch
      %266 = sbr.rel (%p263) target = $region52
    $region51: #{_inverted_residual_forward_impl.1} parent=5 // pred_region
      %s267 = ssub.s32 %s14, 1
      %p268 = scmp.lt.s32.totalorder %s19, 1
      %s269 = scalar_select %p268, %s19, 1
      %s270 = smul.addr %s269, 2
      %s271 = smul.addr %s270, 8
      %s272 = scalar_lea.vmem %s0, %s271
      %p273 = pneg %p40
      %p274 = pneg %p37
      %p275 = pneg %p61
      %p276 = pneg %p58
      %p277 = pneg %p82
      %p278 = pneg %p79
      %p279 = pneg %p103
      %p280 = pneg %p100
      %p281 = pneg %p124
      %p282 = pneg %p121
      %p283 = pneg %p145
      %p284 = pneg %p142
      %p285 = pneg %p166
      %p286 = pneg %p163
      %p287 = pneg %p187
      %p288 = pneg %p184
      %p289 = pneg %p213
      %p290 = pneg %p210
      %p291 = scmp.lt.s32.totalorder %s19, 1
      %s292 = scalar_select %p291, %s19, 1
      %s293 = smul.addr %s292, 2
      %s294 = smul.addr %s293, 8
      %s295 = scalar_lea.vmem %s8, %s294
      %p296 = scmp.lt.s32.totalorder %s19, 1
      %s297 = scalar_select %p296, %s19, 1
      %s298 = smul.addr %s297, 2
      %s299 = smul.addr %s298, 8
      %s300 = scalar_lea.vmem %s0, %s299
      %p301 = scmp.lt.s32.totalorder %s19, 1
      %s302 = scalar_select %p301, %s19, 1
      %s303 = smul.addr %s302, 2
      %s304 = smul.addr %s303, 8
      %s305 = scalar_lea.vmem %s8, %s304
      %v306 = vld [vmem:[%s300] sm:$0xff]
      %v307 = vld [vmem:[%s300 + $0x8] sm:$0xff]
      %v308 = vld [vmem:[%s1] sm:$0xff]
      %v309 = vld [vmem:[%s1 + $0x8] sm:$0xff]
      %v310 = vld [vmem:[%s1 + $0x10] sm:$0xff]
      %v311 = vld [vmem:[%s1 + $0x18] sm:$0xff]
      %v312 = vld [vmem:[%s1 + $0x20] sm:$0xff]
      %v313 = vld [vmem:[%s1 + $0x28] sm:$0xff]
      %v314 = vld [vmem:[%s1 + $0x30] sm:$0xff]
      %v315 = vld [vmem:[%s1 + $0x38] sm:$0xff]
      %v316 = vld [vmem:[%s1 + $0x40] sm:$0xff]
      %v317 = vld [vmem:[%s1 + $0x48] sm:$0xff]
      %v318 = vld [vmem:[%s1 + $0x50] sm:$0xff]
      %v319 = vld [vmem:[%s1 + $0x58] sm:$0xff]
      %v320 = vld [vmem:[%s1 + $0x60] sm:$0xff]
      %v321 = vld [vmem:[%s1 + $0x68] sm:$0xff]
      %v322 = vld [vmem:[%s1 + $0x70] sm:$0xff]
      %v323 = vld [vmem:[%s1 + $0x78] sm:$0xff]
      %v324 = vld [vmem:[%s2] sm:$0x1]
      %v326 = vlaneseq
      %v327 = vshrl.u32 %v326, 7
      %v328 = vsub.s32 0, %v327
      %v329 = vrot.slane %v324, %v328
      %331 = vmatprep.subr.mxu0 0.0
      %332 = vmatpush1.msra.mxu0 %v308
      %333 = vmatprep.subr.mxu0 0.0
      %334 = vmatpush1.msra.mxu0 %v309
      %335 = vmatprep.subr.mxu0 0.0
      %336 = vmatpush1.msra.mxu0 %v310
      %337 = vmatprep.subr.mxu0 0.0
      %338 = vmatpush1.msra.mxu0 %v311
      %339 = vmatprep.subr.mxu0 0.0
      %340 = vmatpush1.msra.mxu0 %v312
      %341 = vmatprep.subr.mxu0 0.0
      %342 = vmatpush1.msra.mxu0 %v313
      %343 = vmatprep.subr.mxu0 0.0
      %344 = vmatpush1.msra.mxu0 %v314
      %345 = vmatprep.subr.mxu0 0.0
      %346 = vmatpush1.msra.mxu0 %v315
      %347 = vmatprep.subr.mxu0 0.0
      %348 = vmatpush1.msra.mxu0 %v316
      %349 = vmatprep.subr.mxu0 0.0
      %350 = vmatpush1.msra.mxu0 %v317
      %351 = vmatprep.subr.mxu0 0.0
      %352 = vmatpush1.msra.mxu0 %v318
      %353 = vmatprep.subr.mxu0 0.0
      %354 = vmatpush1.msra.mxu0 %v319
      %355 = vmatprep.subr.mxu0 0.0
      %356 = vmatpush1.msra.mxu0 %v320
      %357 = vmatprep.subr.mxu0 0.0
      %358 = vmatpush1.msra.mxu0 %v321
      %359 = vmatprep.subr.mxu0 0.0
      %360 = vmatpush1.msra.mxu0 %v322
      %361 = vmatprep.subr.mxu0 0.0
      %362 = vmatpush1.msra.mxu0 %v323
      %363 = vmatprep.subr.mxu0 0.0
      %364 = vmatpush1.msra.mxu0 0.0
      %365 = vmatprep.subr.mxu0 0.0
      %366 = vmatpush1.msra.mxu0 0.0
      %367 = vmatprep.subr.mxu0 0.0
      %368 = vmatpush1.msra.mxu0 0.0
      %369 = vmatprep.subr.mxu0 0.0
      %370 = vmatpush1.msra.mxu0 0.0
      %371 = vmatprep.subr.mxu0 0.0
      %372 = vmatpush1.msra.mxu0 0.0
      %373 = vmatprep.subr.mxu0 0.0
      %374 = vmatpush1.msra.mxu0 0.0
      %375 = vmatprep.subr.mxu0 0.0
      %376 = vmatpush1.msra.mxu0 0.0
      %377 = vmatprep.subr.mxu0 0.0
      %378 = vmatpush1.msra.mxu0 0.0
      %379 = vmatprep.subr.mxu0 0.0
      %380 = vmatpush1.msra.mxu0 0.0
      %381 = vmatprep.subr.mxu0 0.0
      %382 = vmatpush1.msra.mxu0 0.0
      %383 = vmatprep.subr.mxu0 0.0
      %384 = vmatpush1.msra.mxu0 0.0
      %385 = vmatprep.subr.mxu0 0.0
      %386 = vmatpush1.msra.mxu0 0.0
      %387 = vmatprep.subr.mxu0 0.0
      %388 = vmatpush1.msra.mxu0 0.0
      %389 = vmatprep.subr.mxu0 0.0
      %390 = vmatpush1.msra.mxu0 0.0
      %391 = vmatprep.subr.mxu0 0.0
      %392 = vmatpush1.msra.mxu0 0.0
      %393 = vmatprep.subr.mxu0 0.0
      %394 = vmatpush1.msra.mxu0 0.0
      %395 = vmatprep.mubr.f32.mxu0 0.0
      %396 = vmatmul.mubr.f32.gmra.mrb[0].mxu0 %v306
      %v397 = vpop.f32.mrb[0].mxu0
      %v398 = vadd.f32 %v329, %v397
      %v399 = vpop.f32.mrb[0].mxu0
      %400 = vmatprep.mubr.f32.mxu0 0.0
      %401 = vmatmul.mubr.f32.gmra.mrb[0].mxu0 %v307
      %v402 = vpop.f32.mrb[0].mxu0
      %v403 = vadd.f32 %v329, %v402
      %v404 = vpop.f32.mrb[0].mxu0
      %405 = vdwg.mxu0
      %v406 = vmax.f32 %v398, 0.0
      %v407 = vmax.f32 %v403, 0.0
      %v408 = vld [vmem:[%s3] sm:$0xff]
      %v409 = vld [vmem:[%s3 + $0x8] sm:$0x1]
      %v410 = vld [vmem:[%s4] sm:$0x1]
      %vm411 = vcmask 581632
      %412 = vst.msk [vmem:[#allocation2] sm:$0x1] %vm411, 0.0
      %413 = vst.msk [vmem:[#allocation2 + $0x11] sm:$0x1] %vm411, 0.0
      %vm414 = vcmask 31744
      %415 = vst.msk [vmem:[#allocation2 + $0x1] sm:$0xff] %vm414, 0.0
      %416 = vst.msk [vmem:[#allocation2 + $0x9] sm:$0xff] %vm414, 0.0
      %vm417 = vcmask 589344
      %418 = vst.msk [vmem:[#allocation2 + $0x1] sm:$0xff] %vm417, 0.0
      %419 = vst.msk [vmem:[#allocation2 + $0x9] sm:$0xff] %vm417, 0.0
      %422 = vrot.lane.b32.xlu0 %v406, 4
      %v423 = vpop.permute.xlu0 %422
      %424 = vrot.lane.b32.xlu0 %v407, 4
      %v425 = vpop.permute.xlu0 %424
      %vm428 = vcmask 556064
      %429 = vst.msk [vmem:[#allocation2 + $0x1] sm:$0xff] %vm428, %v423
      %430 = vst.msk [vmem:[#allocation2 + $0x9] sm:$0xff] %vm428, %v425
      %v432 = vlaneseq
      %v433 = vshrl.u32 %v432, 7
      %v434 = vsub.s32 0, %v433
      %v435 = vrot.slane %v410, %v434
      %v437 = vld [vmem:[#allocation2] sm:$0xff]
      %v438 = vld [vmem:[#allocation2 + $0x8] sm:$0xff]
      %v439 = vlaneseq
      %v440 = vshrl.u32 %v439, 7
      %v441 = vsub.s32 0, %v440
      %v442 = vrot.slane %v408, %v441
      %v443 = vmul.f32 %v442, %v437
      %v444 = vmul.f32 %v442, %v438
      %v445 = vadd.f32 %v435, %v443
      %v446 = vadd.f32 %v435, %v444
      %v447 = vlaneseq
      %v448 = vshrl.u32 %v447, 7
      %v449 = vsub.s32 1, %v448
      %v450 = vrot.slane %v408, %v449
      %453 = vrot.lane.b32.xlu0 %v437, 124
      %v454 = vpop.permute.xlu0 %453
      %455 = vrot.lane.b32.xlu0 %v438, 124
      %v456 = vpop.permute.xlu0 %455
      %v459 = vmul.f32 %v450, %v454
      %v460 = vmul.f32 %v450, %v456
      %v461 = vadd.f32 %v445, %v459
      %v462 = vadd.f32 %v446, %v460
      %v463 = vlaneseq
      %v464 = vshrl.u32 %v463, 7
      %v465 = vsub.s32 2, %v464
      %v466 = vrot.slane %v408, %v465
      %467 = vrot.lane.b32.xlu0 %v437, 120
      %v468 = vpop.permute.xlu0 %467
      %469 = vrot.lane.b32.xlu0 %v438, 120
      %v470 = vpop.permute.xlu0 %469
      %v473 = vmul.f32 %v466, %v468
      %v474 = vmul.f32 %v466, %v470
      %v475 = vadd.f32 %v461, %v473
      %v476 = vadd.f32 %v462, %v474
      %v477 = vld [vmem:[#allocation2 + $0x1] sm:$0xff]
      %v478 = vld [vmem:[#allocation2 + $0x9] sm:$0xff]
      %v479 = vlaneseq
      %v480 = vshrl.u32 %v479, 7
      %v481 = vsub.s32 3, %v480
      %v482 = vrot.slane %v408, %v481
      %v483 = vmul.f32 %v482, %v477
      %v484 = vmul.f32 %v482, %v478
      %v485 = vadd.f32 %v475, %v483
      %v486 = vadd.f32 %v476, %v484
      %v487 = vlaneseq
      %v488 = vshrl.u32 %v487, 7
      %v489 = vsub.s32 4, %v488
      %v490 = vrot.slane %v408, %v489
      %493 = vrot.lane.b32.xlu0 %v477, 124
      %v494 = vpop.permute.xlu0 %493
      %495 = vrot.lane.b32.xlu0 %v478, 124
      %v496 = vpop.permute.xlu0 %495
      %v499 = vmul.f32 %v490, %v494
      %v500 = vmul.f32 %v490, %v496
      %v501 = vadd.f32 %v485, %v499
      %v502 = vadd.f32 %v486, %v500
      %v503 = vlaneseq
      %v504 = vshrl.u32 %v503, 7
      %v505 = vsub.s32 5, %v504
      %v506 = vrot.slane %v408, %v505
      %507 = vrot.lane.b32.xlu0 %v477, 120
      %v508 = vpop.permute.xlu0 %507
      %509 = vrot.lane.b32.xlu0 %v478, 120
      %v510 = vpop.permute.xlu0 %509
      %v513 = vmul.f32 %v506, %v508
      %v514 = vmul.f32 %v506, %v510
      %v515 = vadd.f32 %v501, %v513
      %v516 = vadd.f32 %v502, %v514
      %v517 = vld [vmem:[#allocation2 + $0x2] sm:$0xff]
      %v518 = vld [vmem:[#allocation2 + $0xa] sm:$0xff]
      %v519 = vlaneseq
      %v520 = vshrl.u32 %v519, 7
      %v521 = vsub.s32 6, %v520
      %v522 = vrot.slane %v408, %v521
      %v523 = vmul.f32 %v522, %v517
      %v524 = vmul.f32 %v522, %v518
      %v525 = vadd.f32 %v515, %v523
      %v526 = vadd.f32 %v516, %v524
      %v527 = vlaneseq
      %v528 = vshrl.u32 %v527, 7
      %v529 = vsub.s32 7, %v528
      %v530 = vrot.slane %v408, %v529
      %533 = vrot.lane.b32.xlu0 %v517, 124
      %v534 = vpop.permute.xlu0 %533
      %535 = vrot.lane.b32.xlu0 %v518, 124
      %v536 = vpop.permute.xlu0 %535
      %v539 = vmul.f32 %v530, %v534
      %v540 = vmul.f32 %v530, %v536
      %v541 = vadd.f32 %v525, %v539
      %v542 = vadd.f32 %v526, %v540
      %v543 = vlaneseq
      %v544 = vshrl.u32 %v543, 7
      %v545 = vsub.s32 0, %v544
      %v546 = vrot.slane %v409, %v545
      %547 = vrot.lane.b32.xlu0 %v517, 120
      %v548 = vpop.permute.xlu0 %547
      %549 = vrot.lane.b32.xlu0 %v518, 120
      %v550 = vpop.permute.xlu0 %549
      %v553 = vmul.f32 %v546, %v548
      %v554 = vmul.f32 %v546, %v550
      %v555 = vadd.f32 %v541, %v553
      %v556 = vadd.f32 %v542, %v554
      %v557 = vld [vmem:[%s5] sm:$0xff]
      %v558 = vld [vmem:[%s5 + $0x8] sm:$0xff]
      %v559 = vld [vmem:[%s5 + $0x10] sm:$0xff]
      %v560 = vld [vmem:[%s5 + $0x18] sm:$0xff]
      %v561 = vld [vmem:[%s5 + $0x20] sm:$0xff]
      %v562 = vld [vmem:[%s5 + $0x28] sm:$0xff]
      %v563 = vld [vmem:[%s5 + $0x30] sm:$0xff]
      %v564 = vld [vmem:[%s5 + $0x38] sm:$0xff]
      %v565 = vld [vmem:[%s6] sm:$0x1]
      %v567 = vlaneseq
      %v568 = vshrl.u32 %v567, 7
      %v569 = vsub.s32 0, %v568
      %v570 = vrot.slane %v565, %v569
      %vm572 = vcmask 523264
      %v574 = vsel %vm572, %v555, 0
      %v577 = vsel %vm572, %v556, 0
      %579 = vmatprep.subr.mxu0 0.0
      %580 = vmatpush1.msra.mxu0 %v557
      %581 = vmatprep.subr.mxu0 0.0
      %582 = vmatpush1.msra.mxu0 %v558
      %583 = vmatprep.subr.mxu0 0.0
      %584 = vmatpush1.msra.mxu0 %v559
      %585 = vmatprep.subr.mxu0 0.0
      %586 = vmatpush1.msra.mxu0 %v560
      %587 = vmatprep.subr.mxu0 0.0
      %588 = vmatpush1.msra.mxu0 %v561
      %589 = vmatprep.subr.mxu0 0.0
      %590 = vmatpush1.msra.mxu0 %v562
      %591 = vmatprep.subr.mxu0 0.0
      %592 = vmatpush1.msra.mxu0 %v563
      %593 = vmatprep.subr.mxu0 0.0
      %594 = vmatpush1.msra.mxu0 %v564
      %595 = vmatprep.subr.mxu0 0.0
      %596 = vmatpush1.msra.mxu0 0.0
      %597 = vmatprep.subr.mxu0 0.0
      %598 = vmatpush1.msra.mxu0 0.0
      %599 = vmatprep.subr.mxu0 0.0
      %600 = vmatpush1.msra.mxu0 0.0
      %601 = vmatprep.subr.mxu0 0.0
      %602 = vmatpush1.msra.mxu0 0.0
      %603 = vmatprep.subr.mxu0 0.0
      %604 = vmatpush1.msra.mxu0 0.0
      %605 = vmatprep.subr.mxu0 0.0
      %606 = vmatpush1.msra.mxu0 0.0
      %607 = vmatprep.subr.mxu0 0.0
      %608 = vmatpush1.msra.mxu0 0.0
      %609 = vmatprep.subr.mxu0 0.0
      %610 = vmatpush1.msra.mxu0 0.0
      %611 = vmatprep.subr.mxu0 0.0
      %612 = vmatpush1.msra.mxu0 0.0
      %613 = vmatprep.subr.mxu0 0.0
      %614 = vmatpush1.msra.mxu0 0.0
      %615 = vmatprep.subr.mxu0 0.0
      %616 = vmatpush1.msra.mxu0 0.0
      %617 = vmatprep.subr.mxu0 0.0
      %618 = vmatpush1.msra.mxu0 0.0
      %619 = vmatprep.subr.mxu0 0.0
      %620 = vmatpush1.msra.mxu0 0.0
      %621 = vmatprep.subr.mxu0 0.0
      %622 = vmatpush1.msra.mxu0 0.0
      %623 = vmatprep.subr.mxu0 0.0
      %624 = vmatpush1.msra.mxu0 0.0
      %625 = vmatprep.subr.mxu0 0.0
      %626 = vmatpush1.msra.mxu0 0.0
      %627 = vmatprep.subr.mxu0 0.0
      %628 = vmatpush1.msra.mxu0 0.0
      %629 = vmatprep.subr.mxu0 0.0
      %630 = vmatpush1.msra.mxu0 0.0
      %631 = vmatprep.subr.mxu0 0.0
      %632 = vmatpush1.msra.mxu0 0.0
      %633 = vmatprep.subr.mxu0 0.0
      %634 = vmatpush1.msra.mxu0 0.0
      %635 = vmatprep.subr.mxu0 0.0
      %636 = vmatpush1.msra.mxu0 0.0
      %637 = vmatprep.subr.mxu0 0.0
      %638 = vmatpush1.msra.mxu0 0.0
      %639 = vmatprep.subr.mxu0 0.0
      %640 = vmatpush1.msra.mxu0 0.0
      %641 = vmatprep.subr.mxu0 0.0
      %642 = vmatpush1.msra.mxu0 0.0
      %643 = vmatprep.mubr.f32.mxu0 0.0
      %644 = vmatmul.mubr.f32.gmra.mrb[0].mxu0 %v574
      %v645 = vpop.f32.mrb[0].mxu0
      %v646 = vadd.f32 %v570, %v645
      %v647 = vpop.f32.mrb[0].mxu0
      %648 = vmatprep.mubr.f32.mxu0 0.0
      %649 = vmatmul.mubr.f32.gmra.mrb[0].mxu0 %v577
      %v650 = vpop.f32.mrb[0].mxu0
      %v651 = vadd.f32 %v570, %v650
      %v652 = vpop.f32.mrb[0].mxu0
      %653 = vdwg.mxu0
      %v654 = vmax.f32 %v646, 0.0
      %v655 = vmax.f32 %v651, 0.0
      %v656 = vld [vmem:[%s7] sm:$0xff]
      %v657 = vld [vmem:[%s7 + $0x8] sm:$0xff]
      %v658 = vld [vmem:[%s7 + $0x10] sm:$0xff]
      %v659 = vld [vmem:[%s7 + $0x18] sm:$0xff]
      %v660 = vld [vmem:[%s7 + $0x20] sm:$0xff]
      %v661 = vld [vmem:[%s7 + $0x28] sm:$0xff]
      %v662 = vld [vmem:[%s7 + $0x30] sm:$0xff]
      %v663 = vld [vmem:[%s7 + $0x38] sm:$0xff]
      %v664 = vld [vmem:[%s7 + $0x40] sm:$0xff]
      %v665 = vld [vmem:[%s7 + $0x48] sm:$0xff]
      %v666 = vld [vmem:[%s7 + $0x50] sm:$0xff]
      %v667 = vld [vmem:[%s7 + $0x58] sm:$0xff]
      %v668 = vld [vmem:[%s7 + $0x60] sm:$0xff]
      %v669 = vld [vmem:[%s7 + $0x68] sm:$0xff]
      %v670 = vld [vmem:[%s7 + $0x70] sm:$0xff]
      %v671 = vld [vmem:[%s7 + $0x78] sm:$0xff]
      %672 = vmatprep.subr.mxu0 0.0
      %673 = vmatpush1.msra.mxu0 %v656
      %674 = vmatprep.subr.mxu0 0.0
      %675 = vmatpush1.msra.mxu0 %v657
      %676 = vmatprep.subr.mxu0 0.0
      %677 = vmatpush1.msra.mxu0 %v658
      %678 = vmatprep.subr.mxu0 0.0
      %679 = vmatpush1.msra.mxu0 %v659
      %680 = vmatprep.subr.mxu0 0.0
      %681 = vmatpush1.msra.mxu0 %v660
      %682 = vmatprep.subr.mxu0 0.0
      %683 = vmatpush1.msra.mxu0 %v661
      %684 = vmatprep.subr.mxu0 0.0
      %685 = vmatpush1.msra.mxu0 %v662
      %686 = vmatprep.subr.mxu0 0.0
      %687 = vmatpush1.msra.mxu0 %v663
      %688 = vmatprep.subr.mxu0 0.0
      %689 = vmatpush1.msra.mxu0 %v664
      %690 = vmatprep.subr.mxu0 0.0
      %691 = vmatpush1.msra.mxu0 %v665
      %692 = vmatprep.subr.mxu0 0.0
      %693 = vmatpush1.msra.mxu0 %v666
      %694 = vmatprep.subr.mxu0 0.0
      %695 = vmatpush1.msra.mxu0 %v667
      %696 = vmatprep.subr.mxu0 0.0
      %697 = vmatpush1.msra.mxu0 %v668
      %698 = vmatprep.subr.mxu0 0.0
      %699 = vmatpush1.msra.mxu0 %v669
      %700 = vmatprep.subr.mxu0 0.0
      %701 = vmatpush1.msra.mxu0 %v670
      %702 = vmatprep.subr.mxu0 0.0
      %703 = vmatpush1.msra.mxu0 %v671
      %704 = vmatprep.subr.mxu0 0.0
      %705 = vmatpush1.msra.mxu0 0.0
      %706 = vmatprep.subr.mxu0 0.0
      %707 = vmatpush1.msra.mxu0 0.0
      %708 = vmatprep.subr.mxu0 0.0
      %709 = vmatpush1.msra.mxu0 0.0
      %710 = vmatprep.subr.mxu0 0.0
      %711 = vmatpush1.msra.mxu0 0.0
      %712 = vmatprep.subr.mxu0 0.0
      %713 = vmatpush1.msra.mxu0 0.0
      %714 = vmatprep.subr.mxu0 0.0
      %715 = vmatpush1.msra.mxu0 0.0
      %716 = vmatprep.subr.mxu0 0.0
      %717 = vmatpush1.msra.mxu0 0.0
      %718 = vmatprep.subr.mxu0 0.0
      %719 = vmatpush1.msra.mxu0 0.0
      %720 = vmatprep.subr.mxu0 0.0
      %721 = vmatpush1.msra.mxu0 0.0
      %722 = vmatprep.subr.mxu0 0.0
      %723 = vmatpush1.msra.mxu0 0.0
      %724 = vmatprep.subr.mxu0 0.0
      %725 = vmatpush1.msra.mxu0 0.0
      %726 = vmatprep.subr.mxu0 0.0
      %727 = vmatpush1.msra.mxu0 0.0
      %728 = vmatprep.subr.mxu0 0.0
      %729 = vmatpush1.msra.mxu0 0.0
      %730 = vmatprep.subr.mxu0 0.0
      %731 = vmatpush1.msra.mxu0 0.0
      %732 = vmatprep.subr.mxu0 0.0
      %733 = vmatpush1.msra.mxu0 0.0
      %734 = vmatprep.subr.mxu0 0.0
      %735 = vmatpush1.msra.mxu0 0.0
      %736 = vmatprep.mubr.f32.mxu0 0.0
      %737 = vmatmul.mubr.f32.gmra.mrb[0].mxu0 %v306
      %v738 = vpop.f32.mrb[0].mxu0
      %v739 = vadd.f32 0.0, %v738
      %v740 = vpop.f32.mrb[0].mxu0
      %741 = vmatprep.mubr.f32.mxu0 0.0
      %742 = vmatmul.mubr.f32.gmra.mrb[0].mxu0 %v307
      %v743 = vpop.f32.mrb[0].mxu0
      %v744 = vadd.f32 0.0, %v743
      %v745 = vpop.f32.mrb[0].mxu0
      %746 = vdwg.mxu0
      %v747 = vadd.f32 %v654, %v739
      %v748 = vadd.f32 %v655, %v744
      %749 = vst [vmem:[%s305] sm:$0xff] %v747
      %750 = vst [vmem:[%s305 + $0x8] sm:$0xff] %v748
      %p751 = scmp.lt.s32.totalorder %s19, 1
      %s752 = scalar_select %p751, %s19, 1
      %s753 = smul.addr %s752, 2
      %s754 = smul.addr %s753, 8
      %s755 = scalar_lea.vmem %s8, %s754
      // Predicated region
      $region53: #{_inverted_residual_forward_impl.1} parent=51 // pred_check
        %p756 = pneg %p210
      $region54: #{_inverted_residual_forward_impl.1} parent=51 // pred_check_branch
        %758 = sbr.rel (%p756) target = $region56
      $region55: #{_inverted_residual_forward_impl.1} parent=51 // pred_region
        _
      $region56: #{_inverted_residual_forward_impl.1} parent=51 // pred_fallthru
        _
    $region52: #{_inverted_residual_forward_impl.1} parent=5 // pred_fallthru
      _
    %p759 = scmp.le.s32.totalorder 2, %s14
    // Predicated region
    $region57: #{_inverted_residual_forward_impl.1} parent=5 // pred_check
      %p760 = pneg %p759
    $region58: #{_inverted_residual_forward_impl.1} parent=5 // pred_check_branch
      %762 = sbr.rel (%p760) target = $region60
    $region59: #{_inverted_residual_forward_impl.1} parent=5 // pred_region
      %s763 = ssub.s32 %s14, 2
      // Predicated region
      $region61: #{_inverted_residual_forward_impl.1} parent=59 // pred_check
        %p764 = pneg %p216
      $region62: #{_inverted_residual_forward_impl.1} parent=59 // pred_check_branch
        %766 = sbr.rel (%p764) target = $region64
      $region63: #{_inverted_residual_forward_impl.1} parent=59 // pred_region
        %p767 = scmp.lt.s32.totalorder %s20, 1
        %s768 = scalar_select %p767, %s20, 1
        %s769 = smul.addr %s768, 2
        %s770 = smul.addr %s769, 8
        %s771 = scalar_lea.vmem %s8, %s770
      $region64: #{_inverted_residual_forward_impl.1} parent=59 // pred_fallthru
        _
    $region60: #{_inverted_residual_forward_impl.1} parent=5 // pred_fallthru
      _
  $region6: #{_inverted_residual_forward_impl.1} parent=0 // loop_footer
    %s18 = sadd.s32 1, %s14
  $region7: #{_inverted_residual_forward_impl.1} parent=0 // loop_footer_branch
    %13 = sbr.rel target = $region3
  $region8: #{_inverted_residual_forward_impl.1} parent=0 // loop_exit
    _

</llo_original>
